<compile_context>
chip_gen: v6e
topology: v6e:2x2x1
jax: 0.10.0
libtpu: 0.0.40
codegen_flags: <defaults>
</compile_context>

<pallas_src>
import math

import jax
import jax.numpy as jnp
from jax.experimental import pallas as pl
from jax.experimental.pallas import tpu as pltpu

GAIN = 2.0

_LANE_TARGET_BYTES = 2 << 20      # ~2 MB of HBM traffic per grid step
_VMEM_BUDGET_BYTES = 20 << 20     # ceiling for the double-buffered block set
_VMEM_LIMIT_BYTES = 32 << 20      # scoped-VMEM limit handed to Mosaic


def _ceil_div(a, b):
    return -(-a // b)


def _plan_lane_tiling(hw, rows):
    """Pick (tile, n_steps, hw_padded) for a (rows, hw) f32 elementwise pass.

    Each grid step moves roughly 3 * rows * tile * 4 bytes of HBM traffic
    (pois read + pattern read + out write); the tile is sized so this is about
    _LANE_TARGET_BYTES while the double-buffered VMEM footprint (2 buffers x
    3 blocks) stays under _VMEM_BUDGET_BYTES.
    """
    hw128 = _ceil_div(hw, 128) * 128
    hbm_bytes_per_lane = 3 * rows * 4
    vmem_bytes_per_lane = 2 * 3 * rows * 4
    cap = min(hw128,
              max(128, _LANE_TARGET_BYTES // hbm_bytes_per_lane),
              max(128, _VMEM_BUDGET_BYTES // vmem_bytes_per_lane))
    cap = max(128, (cap // 128) * 128)
    n = _ceil_div(hw128, cap)
    if hw128 >= 256:
        n = max(n, 2)             # keep both v7x TensorCores busy
    per = _ceil_div(hw128, n)
    tile = _ceil_div(per, 128) * 128
    return tile, n, n * tile


def _make_noise_kernel(scale):
    def kernel(pois_ref, pat_ref, out_ref):
        # out = pois * (gain / 4095) + pattern    -- single full-block store
        out_ref[...] = pois_ref[...] * scale + pat_ref[...]
    return kernel


def apply_noise(pois, noise_pattern, gain=GAIN):
    """out = pois * (gain/4095) + noise_pattern, tiled over the pixel axis."""
    shape = pois.shape
    hw = shape[-1] * shape[-2]
    rows = int(math.prod(shape[:-2]))

    pat = jnp.broadcast_to(noise_pattern, shape)
    pois2 = pois.reshape(rows, hw).astype(jnp.float32)
    pat2 = pat.reshape(rows, hw).astype(jnp.float32)

    tile, n_steps, hw_pad = _plan_lane_tiling(hw, rows)
    if hw_pad != hw:
        pois2 = jnp.pad(pois2, ((0, 0), (0, hw_pad - hw)))
        pat2 = jnp.pad(pat2, ((0, 0), (0, hw_pad - hw)))

    vmem_limit = max(_VMEM_LIMIT_BYTES, 2 * 3 * rows * tile * 4 + (4 << 20))

    out = pl.pallas_call(
        _make_noise_kernel(float(gain) / 4095.0),
        out_shape=jax.ShapeDtypeStruct((rows, hw_pad), jnp.float32),
        grid_spec=pltpu.PrefetchScalarGridSpec(
            num_scalar_prefetch=0,
            grid=(n_steps,),
            in_specs=[pl.BlockSpec((rows, tile), lambda t: (0, t)),
                      pl.BlockSpec((rows, tile), lambda t: (0, t))],
            out_specs=pl.BlockSpec((rows, tile), lambda t: (0, t))),
        compiler_params=pltpu.CompilerParams(
            dimension_semantics=("parallel",),
            vmem_limit_bytes=int(vmem_limit)),
    )(pois2, pat2)

    return out[:, :hw].reshape(shape)


def noise_model_forward(image, ksi, noise_pattern, key, *, gain=GAIN):
    """NoiseModel.forward: (image + noise) * gain + noise_pattern."""
    # TODO(synk): torch.distributions.Poisson sampling has no in-kernel Pallas
    # equivalent; the draw is plain JAX, the surrounding math is the Pallas kernel.
    lam = image * (4095.0 * ksi / gain)
    pois = jax.random.poisson(key, lam).astype(jnp.float32)
    # (image + (pois - image*4095)/4095) * gain + pattern
    #   == pois * gain/4095 + pattern          (exact identity)
    return apply_noise(pois, noise_pattern, gain)


if __name__ == "__main__":
    B, C, H, W = 2, 3, 32, 32

    key = jax.random.PRNGKey(0)
    k_img, k_pat, k_pois = jax.random.split(key, 3)

    image = jax.random.uniform(k_img, (B, C, H, W), jnp.float32)
    noise_pattern = 0.01 * jax.random.uniform(k_pat, (B, C, H, W), jnp.float32)
    ksi = jnp.float32(0.7)

    out = noise_model_forward(image, ksi, noise_pattern, k_pois)
    out = jax.block_until_ready(out)
    assert out.shape == (B, C, H, W)
    assert out.dtype == jnp.float32

    # --- correctness vs. the un-simplified reference formula (same draw) ----
    lam = image * (4095.0 * ksi / GAIN)
    pois = jax.random.poisson(k_pois, lam).astype(jnp.float32)
    noise = (pois - image * 4095.0) / 4095.0
    ref = (image + noise) * GAIN + noise_pattern
    assert jnp.allclose(out, ref, rtol=1e-4, atol=1e-4), float(
        jnp.max(jnp.abs(out - ref)))

    # --- non-lane-aligned spatial size exercises the padding path -----------
    H2, W2 = 17, 19
    img2 = jax.random.uniform(k_img, (B, C, H2, W2), jnp.float32)
    pat2 = 0.01 * jax.random.uniform(k_pat, (B, C, H2, W2), jnp.float32)
    out2 = jax.block_until_ready(noise_model_forward(img2, ksi, pat2, k_pois))
    lam2 = img2 * (4095.0 * ksi / GAIN)
    pois2 = jax.random.poisson(k_pois, lam2).astype(jnp.float32)
    ref2 = (img2 + (pois2 - img2 * 4095.0) / 4095.0) * GAIN + pat2
    assert out2.shape == (B, C, H2, W2)
    assert jnp.allclose(out2, ref2, rtol=1e-4, atol=1e-4)

    print("KERNEL_OK")
</pallas_src>

<mosaic_0001>
module attributes {stable_mosaic.version = 11 : i64} {
  func.func @kernel(%arg0: i32, %arg1: memref<6x512xf32, #tpu.memory_space<vmem>>, %arg2: memref<6x512xf32, #tpu.memory_space<vmem>>, %arg3: memref<6x512xf32, #tpu.memory_space<vmem>>) attributes {dimension_semantics = [#tpu.dimension_semantics<parallel>], iteration_bounds = array<i64: 2>, scalar_prefetch = 0 : i64, scratch_operands = 0 : i64, tpu.core_type = #tpu.core_type<tc>, window_params = [{transform_indices = @transform_0, window_bounds = array<i64: 6, 512>}, {transform_indices = @transform_1, window_bounds = array<i64: 6, 512>}, {transform_indices = @transform_2, window_bounds = array<i64: 6, 512>}]} {
    %c0 = arith.constant 0 : index
    %c0_0 = arith.constant 0 : index
    %0 = vector.load %arg1[%c0, %c0_0] : memref<6x512xf32, #tpu.memory_space<vmem>>, vector<6x512xf32>
    %cst = arith.constant 4.88400517E-4 : f32
    %1 = vector.broadcast %cst : f32 to vector<6x512xf32>
    %2 = arith.mulf %0, %1 : vector<6x512xf32>
    %c0_1 = arith.constant 0 : index
    %c0_2 = arith.constant 0 : index
    %3 = vector.load %arg2[%c0_1, %c0_2] : memref<6x512xf32, #tpu.memory_space<vmem>>, vector<6x512xf32>
    %4 = arith.addf %2, %3 : vector<6x512xf32>
    %c0_3 = arith.constant 0 : index
    %c0_4 = arith.constant 0 : index
    %5 = vector.load %arg3[%c0_3, %c0_4] : memref<6x512xf32, #tpu.memory_space<vmem>>, vector<6x512xf32>
    tpu.vector_store %arg3[%c0_3, %c0_4], %4 {strides = array<i32>} : memref<6x512xf32, #tpu.memory_space<vmem>>, vector<6x512xf32>,
    return
  }
  func.func @transform_0(%arg0: i32) -> (i32, i32) {
    %c0_i32 = arith.constant 0 : i32
    %c0_i32_0 = arith.constant 0 : i32
    return %c0_i32, %arg0 : i32, i32
  }
  func.func @transform_1(%arg0: i32) -> (i32, i32) {
    %c0_i32 = arith.constant 0 : i32
    %c0_i32_0 = arith.constant 0 : i32
    return %c0_i32, %arg0 : i32, i32
  }
  func.func @transform_2(%arg0: i32) -> (i32, i32) {
    %c0_i32 = arith.constant 0 : i32
    %c0_i32_0 = arith.constant 0 : i32
    return %c0_i32, %arg0 : i32, i32
  }
}

</mosaic_0001>

<llo_original>
// kernel: tpu_custom_call.1
$region0: #{tpu_custom_call.1}
  #allocation0 [shape = 'u32[]', space=smem, size = 0x4, offset = 0x4, fixed_abs, tag = 'smem constant byte address 0x4 - core index']
  #allocation1 [shape = 'u32[144,128]{1,0:T(1,128)}', space=vmem, size = 0x12000, scoped, tag = 'internal scratch']
  %s0 = inlined_call_operand.hbm [shape: f32[6,1024], index: 0, kind: input, shape index: {}]
  %s1 = inlined_call_operand.hbm [shape: f32[6,1024], index: 1, kind: input, shape index: {}]
  %s2 = inlined_call_operand.hbm [shape: f32[6,1024], index: 2, kind: output, shape index: {}]
  %s3 = sld [smem:[#allocation0]]
  $region49: #{tpu_custom_call.1} parent=0
    _
  %s5 = ssub.s32 1, %s3
  %s6 = scalar_select 0, %s5, %s3
  $region1: #{tpu_custom_call.1} parent=0
    #allocation2 [shape = 'u8[32768]{0}', space=vmem, size = 0x8000, scoped, tag = 'input window, operand 0']
    #allocation3 [shape = 's32[2]{0}', space=sflag, size = 0x8, scoped, tag = 'scoped memory for tpu_custom_call.1']
    #allocation4 [shape = 's32[2]{0}', space=sflag, size = 0x8, scoped, tag = 'scoped memory for tpu_custom_call.1']
    #allocation5 [shape = 'u8[32768]{0}', space=vmem, size = 0x8000, scoped, tag = 'input window, operand 1']
    #allocation6 [shape = 's32[2]{0}', space=sflag, size = 0x8, scoped, tag = 'scoped memory for tpu_custom_call.1']
    #allocation7 [shape = 'u8[32768]{0}', space=vmem, size = 0x8000, scoped, tag = 'output window, operand 0']
    %7 = vsyncpa [#allocation3], 0
    %s8 = scalar_lea.sflag [#allocation3], 1
    %9 = vsyncpa %s8, 0
    %10 = vsyncpa [#allocation6], 0
    %s11 = scalar_lea.sflag [#allocation6], 1
    %12 = vsyncpa %s11, 0
    %13 = vsyncpa [#allocation4], 0
    %s14 = scalar_lea.sflag [#allocation4], 1
    %15 = vsyncpa %s14, 0
    loop: start=0, step=1, limit=4
    $region2: #{tpu_custom_call.1} parent=1 // loop_pre_header
      _
    $region3: #{tpu_custom_call.1} parent=1 // loop_header
      %s17 = sphi 0, %s21
      %p18 = scmp.ge.s32.totalorder %s17, 4
      %s27 = sphi 0, %s29
      %s30 = sphi 0, %s27
      %s31 = sphi 0, %s30
      %s47 = sphi 0, %s31
      %s53 = sphi 0, %s55
      %s56 = sphi 0, %s53
      %s57 = sphi 0, %s56
      %s73 = sphi 0, %s57
      %s79 = sphi 0, %s81
      %s82 = sphi 0, %s79
      %s83 = sphi 0, %s82
      %s99 = sphi 0, %s83
    $region4: #{tpu_custom_call.1} parent=1 // loop_header_branch
      %20 = sbr.rel (%p18) target = $region8
    $region5: #{tpu_custom_call.1} parent=1 // loop_body
      %s22 = ssub.s32 %s17, 1
      %s23 = ssub.s32 %s17, 2
      %s24 = sadd.s32 %s17, 1
      %s25 = ssub.s32 %s17, %s24
      %p26 = scmp.eq.s32.totalorder %s25, 0
      %s28 = sadd.s32 %s27, 1
      %s29 = scalar_select %p26, %s27, %s28
      %p32 = pneg %p26
      %p33 = scmp.eq.s32.totalorder %s17, 1
      %p34 = por %p32, %p33
      %p35 = scmp.ne.s32.totalorder %s27, %s30
      %p36 = scmp.eq.s32.totalorder %s17, 0
      %p37 = por %p35, %p36
      %p38 = scmp.ne.s32.totalorder %s27, %s30
      %p39 = scmp.eq.s32.totalorder %s22, 1
      %p40 = por %p38, %p39
      %p41 = scmp.ne.s32.totalorder %s30, %s31
      %p42 = scmp.eq.s32.totalorder %s22, 0
      %p43 = por %p41, %p42
      %p44 = scmp.ne.s32.totalorder %s30, %s31
      %p45 = scmp.eq.s32.totalorder %s23, 1
      %p46 = por %p44, %p45
      %p48 = scmp.ne.s32.totalorder %s31, %s47
      %p49 = scmp.eq.s32.totalorder %s23, 0
      %p50 = por %p48, %p49
      %s51 = ssub.s32 %s17, %s24
      %p52 = scmp.eq.s32.totalorder %s51, 0
      %s54 = sadd.s32 %s53, 1
      %s55 = scalar_select %p52, %s53, %s54
      %p58 = pneg %p52
      %p59 = scmp.eq.s32.totalorder %s17, 1
      %p60 = por %p58, %p59
      %p61 = scmp.ne.s32.totalorder %s53, %s56
      %p62 = scmp.eq.s32.totalorder %s17, 0
      %p63 = por %p61, %p62
      %p64 = scmp.ne.s32.totalorder %s53, %s56
      %p65 = scmp.eq.s32.totalorder %s22, 1
      %p66 = por %p64, %p65
      %p67 = scmp.ne.s32.totalorder %s56, %s57
      %p68 = scmp.eq.s32.totalorder %s22, 0
      %p69 = por %p67, %p68
      %p70 = scmp.ne.s32.totalorder %s56, %s57
      %p71 = scmp.eq.s32.totalorder %s23, 1
      %p72 = por %p70, %p71
      %p74 = scmp.ne.s32.totalorder %s57, %s73
      %p75 = scmp.eq.s32.totalorder %s23, 0
      %p76 = por %p74, %p75
      %s77 = ssub.s32 %s17, %s24
      %p78 = scmp.eq.s32.totalorder %s77, 0
      %s80 = sadd.s32 %s79, 1
      %s81 = scalar_select %p78, %s79, %s80
      %p84 = pneg %p78
      %p85 = scmp.eq.s32.totalorder %s17, 1
      %p86 = por %p84, %p85
      %p87 = scmp.ne.s32.totalorder %s79, %s82
      %p88 = scmp.eq.s32.totalorder %s17, 0
      %p89 = por %p87, %p88
      %p90 = scmp.ne.s32.totalorder %s79, %s82
      %p91 = scmp.eq.s32.totalorder %s22, 1
      %p92 = por %p90, %p91
      %p93 = scmp.ne.s32.totalorder %s82, %s83
      %p94 = scmp.eq.s32.totalorder %s22, 0
      %p95 = por %p93, %p94
      %p96 = scmp.ne.s32.totalorder %s82, %s83
      %p97 = scmp.eq.s32.totalorder %s23, 1
      %p98 = por %p96, %p97
      %p100 = scmp.ne.s32.totalorder %s83, %s99
      %p101 = scmp.eq.s32.totalorder %s23, 0
      %p102 = por %p100, %p101
      %p103 = scmp.le.s32.totalorder 1, %s17
      %p104 = scmp.lt.s32.totalorder %s17, 3
      %p105 = pnand %p103, %p104
      %p106 = pneg %p105
      // Predicated region
      $region9: #{tpu_custom_call.1} parent=5 // pred_check
        _
      $region10: #{tpu_custom_call.1} parent=5 // pred_check_branch
        %108 = sbr.rel (%p105) target = $region12
      $region11: #{tpu_custom_call.1} parent=5 // pred_region
        %s109 = ssub.s32 %s17, 1
      $region12: #{tpu_custom_call.1} parent=5 // pred_fallthru
        _
      %p110 = scmp.lt.s32.totalorder %s17, 2
      // Predicated region
      $region13: #{tpu_custom_call.1} parent=5 // pred_check
        %p111 = pneg %p110
      $region14: #{tpu_custom_call.1} parent=5 // pred_check_branch
        %113 = sbr.rel (%p111) target = $region16
      $region15: #{tpu_custom_call.1} parent=5 // pred_region
        // Predicated region
        $region17: #{tpu_custom_call.1} parent=15 // pred_check
          %p114 = pneg %p37
        $region18: #{tpu_custom_call.1} parent=15 // pred_check_branch
          %116 = sbr.rel (%p114) target = $region20
        $region19: #{tpu_custom_call.1} parent=15 // pred_region
          %s117 = sand.u32 %s27, 1
          %s118 = scalar_lea.sflag [#allocation3], %s117
          %s119 = sand.u32 %s27, 1
          %s120 = smul.addr %s119, 32
          %s121 = scalar_lea.vmem [#allocation2], %s120
          %s122 = smul.u32 4, %s17
          %s124 = ssub.s32 512, 512
          %125 = vsyncadd %s118, %s124
          %s126 = smul.addr %s122, 128
          %s127 = scalar_lea.hbm %s0, %s126
          %s129 = sshll.u32 %s121, 4
          %s130 = int_to_ptr.vmem [resolvable:$true] %s129
          %132 = dma.hbm_to_vmem [thread:$0]  %s127, 512, %s130, %s118
        $region20: #{tpu_custom_call.1} parent=15 // pred_fallthru
          _
        // Predicated region
        $region21: #{tpu_custom_call.1} parent=15 // pred_check
          %p133 = pneg %p63
        $region22: #{tpu_custom_call.1} parent=15 // pred_check_branch
          %135 = sbr.rel (%p133) target = $region24
        $region23: #{tpu_custom_call.1} parent=15 // pred_region
          %s136 = sand.u32 %s53, 1
          %s137 = scalar_lea.sflag [#allocation6], %s136
          %s138 = sand.u32 %s53, 1
          %s139 = smul.addr %s138, 32
          %s140 = scalar_lea.vmem [#allocation5], %s139
          %s141 = smul.u32 4, %s17
          %s143 = ssub.s32 512, 512
          %144 = vsyncadd %s137, %s143
          %s145 = smul.addr %s141, 128
          %s146 = scalar_lea.hbm %s1, %s145
          %s148 = sshll.u32 %s140, 4
          %s149 = int_to_ptr.vmem [resolvable:$true] %s148
          %151 = dma.hbm_to_vmem [thread:$0]  %s146, 512, %s149, %s137
        $region24: #{tpu_custom_call.1} parent=15 // pred_fallthru
          _
      $region16: #{tpu_custom_call.1} parent=5 // pred_fallthru
        _
      %p152 = scmp.le.s32.totalorder 1, %s17
      %p153 = scmp.lt.s32.totalorder %s17, 3
      %p154 = pnand %p152, %p153
      %p155 = pneg %p154
      // Predicated region
      $region25: #{tpu_custom_call.1} parent=5 // pred_check
        _
      $region26: #{tpu_custom_call.1} parent=5 // pred_check_branch
        %157 = sbr.rel (%p154) target = $region28
      $region27: #{tpu_custom_call.1} parent=5 // pred_region
        %s158 = ssub.s32 %s17, 1
        %s159 = sand.u32 %s30, 1
        %s160 = scalar_lea.sflag [#allocation3], %s159
        %s161 = sand.u32 %s30, 1
        %s162 = smul.addr %s161, 32
        %s163 = scalar_lea.vmem [#allocation2], %s162
        // Predicated region
        $region29: #{tpu_custom_call.1} parent=27 // pred_check
          %p164 = pneg %p43
        $region30: #{tpu_custom_call.1} parent=27 // pred_check_branch
          %166 = sbr.rel (%p164) target = $region32
        $region31: #{tpu_custom_call.1} parent=27 // pred_region
          %167 = dma.done %s160, 512
        $region32: #{tpu_custom_call.1} parent=27 // pred_fallthru
          _
        %s168 = sand.u32 %s56, 1
        %s169 = scalar_lea.sflag [#allocation6], %s168
        %s170 = sand.u32 %s56, 1
        %s171 = smul.addr %s170, 32
        %s172 = scalar_lea.vmem [#allocation5], %s171
        // Predicated region
        $region33: #{tpu_custom_call.1} parent=27 // pred_check
          %p173 = pneg %p69
        $region34: #{tpu_custom_call.1} parent=27 // pred_check_branch
          %175 = sbr.rel (%p173) target = $region36
        $region35: #{tpu_custom_call.1} parent=27 // pred_region
          %176 = dma.done %s169, 512
        $region36: #{tpu_custom_call.1} parent=27 // pred_fallthru
          _
        %s177 = sand.u32 %s30, 1
        %s178 = scalar_lea.sflag [#allocation3], %s177
        %s179 = sand.u32 %s30, 1
        %s180 = smul.addr %s179, 32
        %s181 = scalar_lea.vmem [#allocation2], %s180
        %p182 = pneg %p43
        %p183 = pneg %p40
        %s184 = sand.u32 %s56, 1
        %s185 = scalar_lea.sflag [#allocation6], %s184
        %s186 = sand.u32 %s56, 1
        %s187 = smul.addr %s186, 32
        %s188 = scalar_lea.vmem [#allocation5], %s187
        %p189 = pneg %p69
        %p190 = pneg %p66
        %p191 = pneg %p95
        %p192 = pneg %p92
        %s193 = sand.u32 %s82, 1
        %s194 = scalar_lea.sflag [#allocation4], %s193
        %s195 = sand.u32 %s82, 1
        %s196 = smul.addr %s195, 32
        %s197 = scalar_lea.vmem [#allocation7], %s196
        %s198 = smul.u32 4, %s22
        %s199 = smul.u32 4, %s22
        %s200 = smul.u32 4, %s22
        %v201 = vld [vmem:[%s163] sm:$0x3f]
        %v202 = vld [vmem:[%s163 + $0x8] sm:$0x3f]
        %v203 = vld [vmem:[%s163 + $0x10] sm:$0x3f]
        %v204 = vld [vmem:[%s163 + $0x18] sm:$0x3f]
        %v205 = vmul.f32 %v201, 0.0004884005
        %v206 = vmul.f32 %v202, 0.0004884005
        %v207 = vmul.f32 %v203, 0.0004884005
        %v208 = vmul.f32 %v204, 0.0004884005
        %v209 = vld [vmem:[%s172] sm:$0x3f]
        %v210 = vld [vmem:[%s172 + $0x8] sm:$0x3f]
        %v211 = vld [vmem:[%s172 + $0x10] sm:$0x3f]
        %v212 = vld [vmem:[%s172 + $0x18] sm:$0x3f]
        %v213 = vadd.f32 %v205, %v209
        %v214 = vadd.f32 %v206, %v210
        %v215 = vadd.f32 %v207, %v211
        %v216 = vadd.f32 %v208, %v212
        %217 = vst [vmem:[%s197] sm:$0x3f] %v213
        %218 = vst [vmem:[%s197 + $0x8] sm:$0x3f] %v214
        %219 = vst [vmem:[%s197 + $0x10] sm:$0x3f] %v215
        %220 = vst [vmem:[%s197 + $0x18] sm:$0x3f] %v216
        %s221 = sand.u32 %s82, 1
        %s222 = scalar_lea.sflag [#allocation4], %s221
        %s223 = sand.u32 %s82, 1
        %s224 = smul.addr %s223, 32
        %s225 = scalar_lea.vmem [#allocation7], %s224
        // Predicated region
        $region37: #{tpu_custom_call.1} parent=27 // pred_check
          %p226 = pneg %p92
        $region38: #{tpu_custom_call.1} parent=27 // pred_check_branch
          %228 = sbr.rel (%p226) target = $region40
        $region39: #{tpu_custom_call.1} parent=27 // pred_region
          %s229 = smul.u32 4, %s22
          %s231 = ssub.s32 512, 512
          %232 = vsyncadd %s222, %s231
          %s233 = smul.addr %s229, 128
          %s234 = scalar_lea.hbm %s2, %s233
          %s236 = sshll.u32 %s225, 4
          %s237 = int_to_ptr.vmem [resolvable:$true] %s236
          %239 = dma.vmem_to_hbm [thread:$0]  %s237, 512, %s234, %s222
        $region40: #{tpu_custom_call.1} parent=27 // pred_fallthru
          _
      $region28: #{tpu_custom_call.1} parent=5 // pred_fallthru
        _
      %p240 = scmp.le.s32.totalorder 2, %s17
      // Predicated region
      $region41: #{tpu_custom_call.1} parent=5 // pred_check
        %p241 = pneg %p240
      $region42: #{tpu_custom_call.1} parent=5 // pred_check_branch
        %243 = sbr.rel (%p241) target = $region44
      $region43: #{tpu_custom_call.1} parent=5 // pred_region
        %s244 = ssub.s32 %s17, 2
        // Predicated region
        $region45: #{tpu_custom_call.1} parent=43 // pred_check
          %p245 = pneg %p98
        $region46: #{tpu_custom_call.1} parent=43 // pred_check_branch
          %247 = sbr.rel (%p245) target = $region48
        $region47: #{tpu_custom_call.1} parent=43 // pred_region
          %s248 = sand.u32 %s83, 1
          %s249 = scalar_lea.sflag [#allocation4], %s248
          %s250 = sand.u32 %s83, 1
          %s251 = smul.addr %s250, 32
          %s252 = scalar_lea.vmem [#allocation7], %s251
          %253 = dma.done %s249, 512
        $region48: #{tpu_custom_call.1} parent=43 // pred_fallthru
          _
      $region44: #{tpu_custom_call.1} parent=5 // pred_fallthru
        _
    $region6: #{tpu_custom_call.1} parent=1 // loop_footer
      %s21 = sadd.s32 1, %s17
    $region7: #{tpu_custom_call.1} parent=1 // loop_footer_branch
      %16 = sbr.rel target = $region3
    $region8: #{tpu_custom_call.1} parent=1 // loop_exit
      _
    %254 = vsyncpa [#allocation3], 1
    %s255 = scalar_lea.sflag [#allocation3], 1
    %256 = vsyncpa %s255, 1
    %257 = vsyncpa [#allocation6], 1
    %s258 = scalar_lea.sflag [#allocation6], 1
    %259 = vsyncpa %s258, 1
    %260 = vsyncpa [#allocation4], 1
    %s261 = scalar_lea.sflag [#allocation4], 1
    %262 = vsyncpa %s261, 1

</llo_original>
